<compile_context>
chip_gen: v6e
topology: v6e:2x2x1
jax: 0.10.0
libtpu: 0.0.40
codegen_flags: <defaults>
</compile_context>

<pallas_src>
import jax
import jax.numpy as jnp
from jax.experimental import pallas as pl
from jax.experimental.pallas import tpu as pltpu

IN_FEATURES = 5
OUT_FEATURES = 5

PAD_N = 128            # weight/bias lane padding -> lane-dense MXU RHS (tiny, one-time)
SINGLE_TILE_ROWS = 1024  # B <= this: single no-grid call (no grid bookkeeping)
MAX_TILE_ROWS = 2048     # cap on the M tile for the gridded path


def linear_gelu_kernel(x_ref, wt_ref, b_ref, o_ref):
    # x_ref: (m, 5), wt_ref: (5, 128), b_ref: (1, 128), o_ref: (m, 5)
    v2 = jnp.dot(x_ref[...], wt_ref[...],
                 preferred_element_type=jnp.float32) + b_ref[...]
    v3 = v2 * 0.5
    v4 = v2 * 0.7071067811865476
    v7 = v3 * (jax.lax.erf(v4) + 1.0)
    # Store only the real output columns (narrow masked store; 25x less
    # HBM writeback than the old 128-lane padded output + host slice).
    o_ref[...] = v7[:, :OUT_FEATURES].astype(o_ref.dtype)


def prepare_params(weight, bias):
    """One-time lane padding of the PyTorch-style W[out,in] and bias."""
    wt_pad = (jnp.zeros((IN_FEATURES, PAD_N), jnp.float32)
              .at[:, :OUT_FEATURES].set(weight.T))
    b_pad = (jnp.zeros((1, PAD_N), jnp.float32)
             .at[0, :OUT_FEATURES].set(bias))
    return wt_pad, b_pad


def _pick_tile_rows(batch):
    """>=2 grid steps (so 'parallel' can shard across v7x's 2 TCs), rows a
    multiple of 8, capped so per-step VMEM stays small on every generation."""
    half = (batch + 1) // 2
    half = ((half + 7) // 8) * 8
    return max(8, min(MAX_TILE_ROWS, half))


def model_forward(x, wt_pad, b_pad):
    """x: (B, 5) float32; wt_pad/b_pad: outputs of prepare_params."""
    batch = x.shape[0]

    if batch <= SINGLE_TILE_ROWS:
        # Single-tile path: one dispatch, no grid, no pads, no slices.
        # Block M dim == full array extent, so any B (even 1) is legal.
        return pl.pallas_call(
            linear_gelu_kernel,
            out_shape=jax.ShapeDtypeStruct((batch, OUT_FEATURES), jnp.float32),
            in_specs=[
                pl.BlockSpec((batch, IN_FEATURES), lambda: (0, 0)),
                pl.BlockSpec((IN_FEATURES, PAD_N), lambda: (0, 0)),
                pl.BlockSpec((1, PAD_N), lambda: (0, 0)),
            ],
            out_specs=pl.BlockSpec((batch, OUT_FEATURES), lambda: (0, 0)),
        )(x, wt_pad, b_pad)

    # Large-batch path: tile M, keep W/bias VMEM-resident (constant index_map),
    # mark the M axis parallel.  Ragged last tile is masked by Pallas.
    tile_m = _pick_tile_rows(batch)
    num_tiles = pl.cdiv(batch, tile_m)
    return pl.pallas_call(
        linear_gelu_kernel,
        out_shape=jax.ShapeDtypeStruct((batch, OUT_FEATURES), jnp.float32),
        grid_spec=pl.GridSpec(
            grid=(num_tiles,),
            in_specs=[
                pl.BlockSpec((tile_m, IN_FEATURES), lambda i: (i, 0)),
                pl.BlockSpec((IN_FEATURES, PAD_N), lambda i: (0, 0)),
                pl.BlockSpec((1, PAD_N), lambda i: (0, 0)),
            ],
            out_specs=pl.BlockSpec((tile_m, OUT_FEATURES), lambda i: (i, 0)),
        ),
        compiler_params=pltpu.CompilerParams(
            dimension_semantics=("parallel",)),
    )(x, wt_pad, b_pad)


def _reference(x, weight, bias):
    v2 = x @ weight.T + bias
    return (v2 * 0.5) * (jax.lax.erf(v2 * 0.7071067811865476) + 1.0)


if __name__ == "__main__":
    key = jax.random.PRNGKey(0)
    kx, kw, kb, kx2 = jax.random.split(key, 4)

    # Input matches the PyTorch module: x2 = torch.randn(1, 5)
    x = jax.random.normal(kx, (1, IN_FEATURES), dtype=jnp.float32)

    # Deterministic "Linear(5, 5)" parameters (uniform like PyTorch default init).
    bound = 1.0 / (IN_FEATURES ** 0.5)
    weight = jax.random.uniform(kw, (OUT_FEATURES, IN_FEATURES),
                                minval=-bound, maxval=bound, dtype=jnp.float32)
    bias = jax.random.uniform(kb, (OUT_FEATURES,),
                              minval=-bound, maxval=bound, dtype=jnp.float32)

    # Pad parameters ONCE (hoisted out of the per-call path).
    wt_pad, b_pad = prepare_params(weight, bias)

    fwd = jax.jit(model_forward)

    # Spec shape (B=1): single dispatch, launch-bound path.
    out = fwd(x, wt_pad, b_pad)
    jax.block_until_ready(out)
    assert out.shape == (1, OUT_FEATURES)
    assert jnp.allclose(out, _reference(x, weight, bias), atol=1e-5, rtol=1e-5)

    # Single-tile path with an odd (non-multiple-of-8) batch.
    x_med = jax.random.normal(kx2, (300, IN_FEATURES), dtype=jnp.float32)
    out_med = fwd(x_med, wt_pad, b_pad)
    jax.block_until_ready(out_med)
    assert jnp.allclose(out_med, _reference(x_med, weight, bias),
                        atol=1e-5, rtol=1e-5)

    # Gridded path: 2 parallel M tiles (both v7x TensorCores usable).
    x_big = jax.random.normal(jax.random.PRNGKey(1), (2512, IN_FEATURES),
                              dtype=jnp.float32)
    out_big = fwd(x_big, wt_pad, b_pad)
    jax.block_until_ready(out_big)
    assert jnp.allclose(out_big, _reference(x_big, weight, bias),
                        atol=1e-5, rtol=1e-5)

    print("KERNEL_OK")
</pallas_src>

<mosaic_0001>
module attributes {stable_mosaic.version = 11 : i64} {
  func.func @linear_gelu_kernel(%arg0: memref<1x5xf32, #tpu.memory_space<vmem>>, %arg1: memref<5x128xf32, #tpu.memory_space<vmem>>, %arg2: memref<1x128xf32, #tpu.memory_space<vmem>>, %arg3: memref<1x5xf32, #tpu.memory_space<vmem>>) attributes {dimension_semantics = [], scalar_prefetch = 0 : i64, scratch_operands = 0 : i64, tpu.core_type = #tpu.core_type<tc>} {
    %c0 = arith.constant 0 : index
    %c0_0 = arith.constant 0 : index
    %0 = vector.load %arg0[%c0, %c0_0] : memref<1x5xf32, #tpu.memory_space<vmem>>, vector<1x5xf32>
    %c0_1 = arith.constant 0 : index
    %c0_2 = arith.constant 0 : index
    %1 = vector.load %arg1[%c0_1, %c0_2] : memref<5x128xf32, #tpu.memory_space<vmem>>, vector<5x128xf32>
    %cst = arith.constant dense<0.000000e+00> : vector<1x128xf32>
    %2 = tpu.matmul %0, %1, %cst {dimension_numbers = #tpu.dot_dimension_numbers<[1], [0], [0], [1], [0, 0, 1, 1], [], []>} : vector<1x5xf32>, vector<5x128xf32>, vector<1x128xf32> -> vector<1x128xf32>
    %c0_3 = arith.constant 0 : index
    %c0_4 = arith.constant 0 : index
    %3 = vector.load %arg2[%c0_3, %c0_4] : memref<1x128xf32, #tpu.memory_space<vmem>>, vector<1x128xf32>
    %4 = arith.addf %2, %3 : vector<1x128xf32>
    %cst_5 = arith.constant 5.000000e-01 : f32
    %5 = vector.broadcast %cst_5 : f32 to vector<1x128xf32>
    %6 = arith.mulf %4, %5 : vector<1x128xf32>
    %cst_6 = arith.constant 0.707106769 : f32
    %7 = vector.broadcast %cst_6 : f32 to vector<1x128xf32>
    %8 = arith.mulf %4, %7 : vector<1x128xf32>
    %9 = math.erf %8 : vector<1x128xf32>
    %cst_7 = arith.constant 1.000000e+00 : f32
    %10 = vector.broadcast %cst_7 : f32 to vector<1x128xf32>
    %11 = arith.addf %9, %10 : vector<1x128xf32>
    %12 = arith.mulf %6, %11 : vector<1x128xf32>
    %13 = vector.extract_strided_slice %12 {offsets = [0, 0], sizes = [1, 5], strides = [1, 1]} : vector<1x128xf32> to vector<1x5xf32>
    %c0_8 = arith.constant 0 : index
    %c0_9 = arith.constant 0 : index
    %14 = vector.load %arg3[%c0_8, %c0_9] : memref<1x5xf32, #tpu.memory_space<vmem>>, vector<1x5xf32>
    tpu.vector_store %arg3[%c0_8, %c0_9], %13 {strides = array<i32>} : memref<1x5xf32, #tpu.memory_space<vmem>>, vector<1x5xf32>,
    return
  }
}

</mosaic_0001>

<llo_original>
// kernel: model_forward.1
$region0: #{model_forward.1}
  #allocation0 [shape = 'u32[]', space=smem, size = 0x4, offset = 0x4, fixed_abs, tag = 'smem constant byte address 0x4 - core index']
  #allocation1 [shape = 'u32[144,128]{1,0:T(1,128)}', space=vmem, size = 0x12000, scoped, tag = 'internal scratch']
  %s0 = inlined_call_operand.hbm [shape: f32[1,5], index: 0, kind: input, shape index: {}]
  %s1 = inlined_call_operand.hbm [shape: f32[5,128], index: 1, kind: input, shape index: {}]
  %s2 = inlined_call_operand.vmem [shape: f32[1,128], index: 2, kind: input, shape index: {}]
  %s3 = inlined_call_operand.hbm [shape: f32[1,5], index: 3, kind: output, shape index: {}]
  %s4 = sld [smem:[#allocation0]]
  $region30: #{model_forward.1} parent=0
    _
  %s6 = ssub.s32 1, %s4
  %s7 = scalar_select 0, %s6, %s4
  $region1: #{model_forward.1} parent=0
    #allocation2 [shape = 'u8[512]{0}', space=vmem, size = 0x400, scoped, tag = 'input window, operand 0, single buffered']
    #allocation3 [shape = 's32[1]{0}', space=sflag, size = 0x4, scoped, tag = 'scoped memory for model_forward.1']
    #allocation4 [shape = 's32[1]{0}', space=sflag, size = 0x4, scoped, tag = 'scoped memory for model_forward.1']
    #allocation5 [shape = 'u8[4096]{0}', space=vmem, size = 0x1000, scoped, tag = 'input window, operand 1, single buffered']
    #allocation6 [shape = 's32[1]{0}', space=sflag, size = 0x4, scoped, tag = 'scoped memory for model_forward.1']
    #allocation7 [shape = 'u8[512]{0}', space=vmem, size = 0x400, scoped, tag = 'output window, operand 0, single buffered']
    %8 = vsyncpa [#allocation3], 0
    %9 = vsyncpa [#allocation6], 0
    %10 = vsyncpa [#allocation4], 0
    // Predicated region
    $region2: #{model_forward.1} parent=1 // pred_check
      _
    $region3: #{model_forward.1} parent=1 // pred_check_branch
      %12 = sbr.rel (0) target = $region5
    $region4: #{model_forward.1} parent=1 // pred_region
      %s14 = ssub.s32 16, 16
      %15 = vsyncadd [#allocation3], %s14
      %s17 = sshll.u32 [#allocation2], 4
      %s18 = int_to_ptr.vmem [resolvable:$true] %s17
      %20 = dma.hbm_to_vmem [thread:$0]  %s0, 16, %s18, [#allocation3]
    $region5: #{model_forward.1} parent=1 // pred_fallthru
      _
    // Predicated region
    $region6: #{model_forward.1} parent=1 // pred_check
      _
    $region7: #{model_forward.1} parent=1 // pred_check_branch
      %22 = sbr.rel (0) target = $region9
    $region8: #{model_forward.1} parent=1 // pred_region
      %s24 = ssub.s32 128, 128
      %25 = vsyncadd [#allocation6], %s24
      %s27 = sshll.u32 [#allocation5], 4
      %s28 = int_to_ptr.vmem [resolvable:$true] %s27
      %30 = dma.hbm_to_vmem [thread:$0]  %s1, 128, %s28, [#allocation6]
    $region9: #{model_forward.1} parent=1 // pred_fallthru
      _
    // Predicated region
    $region10: #{model_forward.1} parent=1 // pred_check
      _
    $region11: #{model_forward.1} parent=1 // pred_check_branch
      %32 = sbr.rel (0) target = $region13
    $region12: #{model_forward.1} parent=1 // pred_region
      _
    $region13: #{model_forward.1} parent=1 // pred_fallthru
      _
    // Predicated region
    $region14: #{model_forward.1} parent=1 // pred_check
      _
    $region15: #{model_forward.1} parent=1 // pred_check_branch
      %34 = sbr.rel (0) target = $region17
    $region16: #{model_forward.1} parent=1 // pred_region
      %35 = dma.done [#allocation3], 16
    $region17: #{model_forward.1} parent=1 // pred_fallthru
      _
    // Predicated region
    $region18: #{model_forward.1} parent=1 // pred_check
      _
    $region19: #{model_forward.1} parent=1 // pred_check_branch
      %37 = sbr.rel (0) target = $region21
    $region20: #{model_forward.1} parent=1 // pred_region
      %38 = dma.done [#allocation6], 128
    $region21: #{model_forward.1} parent=1 // pred_fallthru
      _
    %v39 = vld [vmem:[#allocation2] sm:$0x1]
    %v40 = vld [vmem:[#allocation5] sm:$0x1f]
    %v41 = vld [vmem:[%s2] sm:$0x1]
    %vm42 = vcmask 39936
    %v44 = vsel %vm42, %v39, 0
    %vm46 = vcmask 1044480
    %v48 = vsel %vm46, %v40, 0
    %50 = vmatprep.subr.mxu0 0.0
    %51 = vmatpush1.msra.mxu0 0.0
    %52 = vmatprep.subr.mxu0 0.0
    %53 = vmatpush1.msra.mxu0 0.0
    %54 = vmatprep.subr.mxu0 0.0
    %55 = vmatpush1.msra.mxu0 0.0
    %56 = vmatprep.subr.mxu0 0.0
    %57 = vmatpush1.msra.mxu0 0.0
    %58 = vmatprep.subr.mxu0 0.0
    %59 = vmatpush1.msra.mxu0 0.0
    %60 = vmatprep.subr.mxu0 0.0
    %61 = vmatpush1.msra.mxu0 0.0
    %62 = vmatprep.subr.mxu0 0.0
    %63 = vmatpush1.msra.mxu0 0.0
    %64 = vmatprep.subr.mxu0 0.0
    %65 = vmatpush1.msra.mxu0 0.0
    %66 = vmatprep.subr.mxu0 0.0
    %67 = vmatpush1.msra.mxu0 0.0
    %68 = vmatprep.subr.mxu0 0.0
    %69 = vmatpush1.msra.mxu0 0.0
    %70 = vmatprep.subr.mxu0 0.0
    %71 = vmatpush1.msra.mxu0 0.0
    %72 = vmatprep.subr.mxu0 0.0
    %73 = vmatpush1.msra.mxu0 0.0
    %74 = vmatprep.subr.mxu0 0.0
    %75 = vmatpush1.msra.mxu0 0.0
    %76 = vmatprep.subr.mxu0 0.0
    %77 = vmatpush1.msra.mxu0 0.0
    %78 = vmatprep.subr.mxu0 0.0
    %79 = vmatpush1.msra.mxu0 0.0
    %80 = vmatprep.subr.mxu0 0.0
    %81 = vmatpush1.msra.mxu0 %v48
    %82 = vmatprep.subr.mxu0 0.0
    %83 = vmatpush2.msra.mxu0 0.0
    %84 = vmatprep.subr.mxu0 0.0
    %85 = vmatpush2.msra.mxu0 0.0
    %86 = vmatprep.subr.mxu0 0.0
    %87 = vmatpush2.msra.mxu0 0.0
    %88 = vmatprep.subr.mxu0 0.0
    %89 = vmatpush2.msra.mxu0 0.0
    %90 = vmatprep.subr.mxu0 0.0
    %91 = vmatpush2.msra.mxu0 0.0
    %92 = vmatprep.subr.mxu0 0.0
    %93 = vmatpush2.msra.mxu0 0.0
    %94 = vmatprep.subr.mxu0 0.0
    %95 = vmatpush2.msra.mxu0 0.0
    %96 = vmatprep.subr.mxu0 0.0
    %97 = vmatpush2.msra.mxu0 0.0
    %98 = vmatprep.subr.mxu0 0.0
    %99 = vmatpush2.msra.mxu0 0.0
    %100 = vmatprep.subr.mxu0 0.0
    %101 = vmatpush2.msra.mxu0 0.0
    %102 = vmatprep.subr.mxu0 0.0
    %103 = vmatpush2.msra.mxu0 0.0
    %104 = vmatprep.subr.mxu0 0.0
    %105 = vmatpush2.msra.mxu0 0.0
    %106 = vmatprep.subr.mxu0 0.0
    %107 = vmatpush2.msra.mxu0 0.0
    %108 = vmatprep.subr.mxu0 0.0
    %109 = vmatpush2.msra.mxu0 0.0
    %110 = vmatprep.subr.mxu0 0.0
    %111 = vmatpush2.msra.mxu0 0.0
    %112 = vmatprep.subr.mxu0 0.0
    %113 = vmatpush2.msra.mxu0 0.0
    %114 = vmatprep.mubr.f32.mxu0 0.0
    %115 = vmatmul.mubr.f32.gmra.mxu0 %v44
    %v116 = vpop.f32.mrf.mxu0
    %v117 = vadd.f32 %v41, %v116
    %v118 = vpop.f32.mrf.mxu0
    %119 = vdwg.mxu0
    %v120 = vmul.f32 %v117, 0.5
    %v121 = vmul.f32 %v117, 0.70710677
    %v122 = verf.f32.pop %v121
    %v123 = vadd.f32 %v122, 1.0
    %v124 = vmul.f32 %v120, %v123
    %vm125 = vcmask 32768
    %126 = vst.msk [vmem:[#allocation7] sm:$0x1] %vm125, %v124
    // Predicated region
    $region22: #{model_forward.1} parent=1 // pred_check
      _
    $region23: #{model_forward.1} parent=1 // pred_check_branch
      %128 = sbr.rel (0) target = $region25
    $region24: #{model_forward.1} parent=1 // pred_region
      %s130 = ssub.s32 16, 16
      %131 = vsyncadd [#allocation4], %s130
      %s133 = sshll.u32 [#allocation7], 4
      %s134 = int_to_ptr.vmem [resolvable:$true] %s133
      %136 = dma.vmem_to_hbm [thread:$0]  %s134, 16, %s3, [#allocation4]
    $region25: #{model_forward.1} parent=1 // pred_fallthru
      _
    // Predicated region
    $region26: #{model_forward.1} parent=1 // pred_check
      _
    $region27: #{model_forward.1} parent=1 // pred_check_branch
      %138 = sbr.rel (0) target = $region29
    $region28: #{model_forward.1} parent=1 // pred_region
      %139 = dma.done [#allocation4], 16
    $region29: #{model_forward.1} parent=1 // pred_fallthru
      _
    %140 = vsyncpa [#allocation3], 1
    %141 = vsyncpa [#allocation6], 1
    %142 = vsyncpa [#allocation4], 1

</llo_original>
